<compile_context>
chip_gen: v7x
topology: tpu7x:2x2x1
jax: 0.10.0
libtpu: 0.0.40
codegen_flags: <defaults>
</compile_context>

<pallas_src>
import jax
import jax.numpy as jnp
from jax.experimental import pallas as pl
from jax.experimental.pallas import tpu as pltpu


# ----------------------------- Pallas kernel --------------------------------
def _aux_kernel(x_ref, w_ref, b_ref, o_ref):
    # x_ref : (TB, CHW)     -- lane-dense batch tile (pool folded into matmul)
    # w_ref : (CHW, N_pad)  -- per-(channel,spatial) weights, pre-scaled by
    #                          1/HW, zero-padded to a lane-dense 128-wide N
    # b_ref : (1, N_pad)    -- concatenated head biases (f32), zero-padded
    # o_ref : (TB, N_pad)   -- f32 logits
    acc = jnp.dot(x_ref[...], w_ref[...],
                  preferred_element_type=jnp.float32)      # MXU, f32 accum
    o_ref[...] = (acc + b_ref[...]).astype(o_ref.dtype)


# ----------------------------- param prep ------------------------------------
def prepare_aux_params(w_cat, b_cat, hw, compute_dtype=jnp.bfloat16,
                       lane_pad=128):
    """Fold 1/HW into W, expand to (C*HW, N_pad) for pool-as-matmul, pad N."""
    C, n_total = w_cat.shape
    n_pad = pl.cdiv(n_total, lane_pad) * lane_pad
    w_scaled = (w_cat * (1.0 / float(hw))).astype(jnp.float32)        # (C, N)
    w_pad = jnp.zeros((C, n_pad), jnp.float32).at[:, :n_total].set(w_scaled)
    # Row c*HW + k of W_big corresponds to x[:, c, k // W, k % W] after the
    # (B, C, H, W) -> (B, C*H*W) row-major flatten, so jnp.repeat along axis 0
    # (each channel row repeated HW consecutive times) is the exact match.
    w_big = jnp.repeat(w_pad, hw, axis=0).astype(compute_dtype)  # (C*HW, N_pad)
    b_pad = jnp.zeros((1, n_pad), jnp.float32).at[0, :n_total].set(
        b_cat.astype(jnp.float32))
    return w_big, b_pad


# ----------------------------- tiling -----------------------------------------
def _choose_tb(B, chw, itemsize):
    """Batch tile: biggest that keeps the double-buffered x tile within a
    budget safe for v5e's 16 MiB default scoped VMEM; multiple of 8; >=2 grid
    steps when B is large (megacore sharding on v7x)."""
    budget = 12 << 20                                    # x double-buffer cap
    cap = max(8, (budget // (2 * chw * itemsize)) // 8 * 8)
    if B <= 8:
        return B                                         # tiny batch: one tile
    n_tiles = max(2, pl.cdiv(B, cap))                    # >=2 parallel steps
    tb = pl.cdiv(pl.cdiv(B, n_tiles), 8) * 8             # sublane-dense tiles
    return min(tb, cap)


# ----------------------------- wrapper ----------------------------------------
def resnet_aux_forward(x_nchw, w_big, b_pad, head_sizes,
                       compute_dtype=jnp.bfloat16):
    """x_nchw: (B, C, 24, 8). Returns tuple of 10 per-head logit arrays."""
    B, C, H, W = x_nchw.shape
    assert (H, W) == (24, 8), "AvgPool2d kernel is fixed at (24, 8)"
    chw = C * H * W
    n_total = sum(head_sizes)
    n_pad = w_big.shape[1]
    assert w_big.shape[0] == chw

    # Plain-JAX glue: lane-dense flatten + cast to the MXU input dtype.
    x2d = x_nchw.reshape(B, chw).astype(compute_dtype)

    itemsize = jnp.dtype(compute_dtype).itemsize
    tb = _choose_tb(B, chw, itemsize)
    grid = (pl.cdiv(B, tb),)

    # Explicit VMEM limit from the actual tile footprint (with headroom),
    # capped below v7x's 64 MiB physical VMEM.
    vmem_bytes = (2 * tb * chw * itemsize        # x double-buffer
                  + chw * n_pad * itemsize       # resident W_big
                  + n_pad * 4                    # bias
                  + 2 * tb * n_pad * 4)          # output double-buffer
    vmem_limit = int(min(max(2 * vmem_bytes, 16 << 20), 48 << 20))

    out = pl.pallas_call(
        _aux_kernel,
        out_shape=jax.ShapeDtypeStruct((B, n_pad), jnp.float32),
        grid_spec=pltpu.PrefetchScalarGridSpec(
            num_scalar_prefetch=0,
            grid=grid,
            in_specs=[
                pl.BlockSpec((tb, chw), lambda i: (i, 0)),
                pl.BlockSpec((chw, n_pad), lambda i: (0, 0)),
                pl.BlockSpec((1, n_pad), lambda i: (0, 0)),
            ],
            out_specs=pl.BlockSpec((tb, n_pad), lambda i: (i, 0)),
        ),
        compiler_params=pltpu.CompilerParams(
            dimension_semantics=("parallel",),
            vmem_limit_bytes=vmem_limit),
    )(x2d, w_big, b_pad)

    # Drop padded lanes, split back into the 10 heads (glue).
    logits = out[:, :n_total]
    outs, off = [], 0
    for n in head_sizes:
        outs.append(logits[:, off:off + n])
        off += n
    return tuple(outs)


# ----------------------------- parameter setup -------------------------------
def init_params(key, in_channels, num_classes):
    """Deterministic per-head Linear params, concatenated along output dim."""
    heads = ["gender", "hat", "glasses", "longcoat", "boots",
             "age", "position", "bag", "sleeve", "trousers"]
    head_sizes = [num_classes[h] for h in heads]
    ws, bs = [], []
    k = key
    bound = 1.0 / jnp.sqrt(in_channels)
    for n in head_sizes:
        k, kw, kb = jax.random.split(k, 3)
        ws.append(jax.random.uniform(kw, (in_channels, n), jnp.float32,
                                     minval=-bound, maxval=bound))
        bs.append(jax.random.uniform(kb, (n,), jnp.float32,
                                     minval=-bound, maxval=bound))
    w_cat = jnp.concatenate(ws, axis=1)   # (C, N_total)
    b_cat = jnp.concatenate(bs, axis=0)   # (N_total,)
    return w_cat, b_cat, head_sizes


# --------------------------------- main --------------------------------------
if __name__ == "__main__":
    key = jax.random.PRNGKey(0)

    B = 2
    in_channels = 8
    num_classes = {
        "gender": 2, "hat": 2, "glasses": 2, "longcoat": 2, "boots": 2,
        "age": 4, "position": 3, "bag": 2, "sleeve": 2, "trousers": 3,
    }

    kx, kp = jax.random.split(key)
    # Input must be (B, C, 24, 8) so the (24,8) avg-pool collapses spatial to 1x1.
    x = jax.random.normal(kx, (B, in_channels, 24, 8), jnp.float32)
    w_cat, b_cat, head_sizes = init_params(kp, in_channels, num_classes)

    # Pure-JAX reference of the original module.
    pooled_ref = jnp.mean(x.reshape(B, in_channels, -1), axis=-1)
    ref = pooled_ref @ w_cat + b_cat

    hw = 24 * 8

    # --- f32 path: tight correctness check of the pool-as-matmul kernel. ----
    w_big32, b_pad32 = prepare_aux_params(w_cat, b_cat, hw,
                                          compute_dtype=jnp.float32)
    outs32 = resnet_aux_forward(x, w_big32, b_pad32, head_sizes,
                                compute_dtype=jnp.float32)
    outs32 = jax.block_until_ready(outs32)
    got32 = jnp.concatenate(outs32, axis=1)
    assert got32.shape == (B, sum(head_sizes))
    assert all(o.shape == (B, n) for o, n in zip(outs32, head_sizes))
    assert jnp.allclose(got32, ref, atol=1e-4, rtol=1e-4)

    # --- bf16 path (recommended HBM-bound production path). ------------------
    w_big16, b_pad16 = prepare_aux_params(w_cat, b_cat, hw,
                                          compute_dtype=jnp.bfloat16)
    outs16 = resnet_aux_forward(x, w_big16, b_pad16, head_sizes,
                                compute_dtype=jnp.bfloat16)
    outs16 = jax.block_until_ready(outs16)
    got16 = jnp.concatenate(outs16, axis=1)
    assert got16.shape == (B, sum(head_sizes))
    assert jnp.allclose(got16, ref, atol=3e-2, rtol=3e-2)

    print("KERNEL_OK")
</pallas_src>

<mosaic_0001>
module attributes {stable_mosaic.version = 11 : i64} {
  func.func @_aux_kernel(%arg0: i32, %arg1: memref<2x1536xf32, #tpu.memory_space<vmem>>, %arg2: memref<1536x128xf32, #tpu.memory_space<vmem>>, %arg3: memref<1x128xf32, #tpu.memory_space<vmem>>, %arg4: memref<2x128xf32, #tpu.memory_space<vmem>>) attributes {dimension_semantics = [#tpu.dimension_semantics<parallel>], iteration_bounds = array<i64: 1>, scalar_prefetch = 0 : i64, scratch_operands = 0 : i64, tpu.core_type = #tpu.core_type<tc>, window_params = [{transform_indices = @transform_0, window_bounds = array<i64: 2, 1536>}, {pipeline_mode = #tpu.pipeline_mode<synchronous>, transform_indices = @transform_1, window_bounds = array<i64: 1536, 128>}, {pipeline_mode = #tpu.pipeline_mode<synchronous>, transform_indices = @transform_2, window_bounds = array<i64: 1, 128>}, {transform_indices = @transform_3, window_bounds = array<i64: 2, 128>}]} {
    %c0 = arith.constant 0 : index
    %c0_0 = arith.constant 0 : index
    %0 = vector.load %arg1[%c0, %c0_0] : memref<2x1536xf32, #tpu.memory_space<vmem>>, vector<2x1536xf32>
    %c0_1 = arith.constant 0 : index
    %c0_2 = arith.constant 0 : index
    %1 = vector.load %arg2[%c0_1, %c0_2] : memref<1536x128xf32, #tpu.memory_space<vmem>>, vector<1536x128xf32>
    %cst = arith.constant dense<0.000000e+00> : vector<2x128xf32>
    %2 = tpu.matmul %0, %1, %cst {dimension_numbers = #tpu.dot_dimension_numbers<[1], [0], [0], [1], [0, 0, 1, 1], [], []>} : vector<2x1536xf32>, vector<1536x128xf32>, vector<2x128xf32> -> vector<2x128xf32>
    %c0_3 = arith.constant 0 : index
    %c0_4 = arith.constant 0 : index
    %3 = vector.load %arg3[%c0_3, %c0_4] : memref<1x128xf32, #tpu.memory_space<vmem>>, vector<1x128xf32>
    %4 = vector.broadcast %3 : vector<1x128xf32> to vector<2x128xf32>
    %5 = arith.addf %2, %4 : vector<2x128xf32>
    %c0_5 = arith.constant 0 : index
    %c0_6 = arith.constant 0 : index
    %6 = vector.load %arg4[%c0_5, %c0_6] : memref<2x128xf32, #tpu.memory_space<vmem>>, vector<2x128xf32>
    tpu.vector_store %arg4[%c0_5, %c0_6], %5 {strides = array<i32>} : memref<2x128xf32, #tpu.memory_space<vmem>>, vector<2x128xf32>,
    return
  }
  func.func @transform_0(%arg0: i32) -> (i32, i32) {
    %c0_i32 = arith.constant 0 : i32
    %c0_i32_0 = arith.constant 0 : i32
    return %arg0, %c0_i32 : i32, i32
  }
  func.func @transform_1(%arg0: i32) -> (i32, i32) {
    %c0_i32 = arith.constant 0 : i32
    %c0_i32_0 = arith.constant 0 : i32
    %c0_i32_1 = arith.constant 0 : i32
    return %c0_i32, %c0_i32_0 : i32, i32
  }
  func.func @transform_2(%arg0: i32) -> (i32, i32) {
    %c0_i32 = arith.constant 0 : i32
    %c0_i32_0 = arith.constant 0 : i32
    %c0_i32_1 = arith.constant 0 : i32
    return %c0_i32, %c0_i32_0 : i32, i32
  }
  func.func @transform_3(%arg0: i32) -> (i32, i32) {
    %c0_i32 = arith.constant 0 : i32
    %c0_i32_0 = arith.constant 0 : i32
    return %arg0, %c0_i32 : i32, i32
  }
}

</mosaic_0001>

<llo_original>
// kernel: tpu_custom_call.1
$region0: #{tpu_custom_call.1}
  #allocation0 [shape = 'u32[]', space=smem, size = 0x4, offset = 0x4, fixed_abs, tag = 'smem constant byte address 0x4 - core index']
  #allocation1 [shape = 'u32[144,128]{1,0:T(1,128)}', space=vmem, size = 0x12000, scoped, tag = 'internal scratch']
  %s0 = inlined_call_operand.hbm [shape: f32[2,1536], index: 0, kind: input, shape index: {}]
  %s1 = inlined_call_operand.hbm [shape: f32[1536,128], index: 1, kind: input, shape index: {}]
  %s2 = inlined_call_operand.vmem [shape: f32[1,128], index: 2, kind: input, shape index: {}]
  %s3 = inlined_call_operand.hbm [shape: f32[2,128], index: 3, kind: output, shape index: {}]
  %s4 = sld [smem:[#allocation0]]
  $region30: #{tpu_custom_call.1} parent=0
    _
  %s6 = ssub.s32 1, %s4
  %s7 = scalar_select 0, %s6, %s4
  $region1: #{tpu_custom_call.1} parent=0
    #allocation2 [shape = 'u8[12288]{0}', space=vmem, size = 0x3000, scoped, tag = 'input window, operand 0, single buffered']
    #allocation3 [shape = 's32[1]{0}', space=sflag, size = 0x4, scoped, tag = 'scoped memory for tpu_custom_call.1']
    #allocation4 [shape = 's32[1]{0}', space=sflag, size = 0x4, scoped, tag = 'scoped memory for tpu_custom_call.1']
    #allocation5 [shape = 'u8[786432]{0}', space=vmem, size = 0xc0000, scoped, tag = 'input window, operand 1, single buffered']
    #allocation6 [shape = 's32[1]{0}', space=sflag, size = 0x4, scoped, tag = 'scoped memory for tpu_custom_call.1']
    #allocation7 [shape = 'u8[1024]{0}', space=vmem, size = 0x400, scoped, tag = 'output window, operand 0, single buffered']
    %8 = vsyncpa [#allocation3], 0
    %9 = vsyncpa [#allocation6], 0
    %10 = vsyncpa [#allocation4], 0
    // Predicated region
    $region2: #{tpu_custom_call.1} parent=1 // pred_check
      _
    $region3: #{tpu_custom_call.1} parent=1 // pred_check_branch
      %12 = sbr.rel (0) target = $region5
    $region4: #{tpu_custom_call.1} parent=1 // pred_region
      %s14 = ssub.s32 384, 384
      %15 = vsyncadd [#allocation3], %s14
      %s17 = sshll.u32 [#allocation2], 4
      %s18 = int_to_ptr.vmem [resolvable:$true] %s17
      %20 = dma.hbm_to_vmem [thread:$0]  %s0, 384, %s18, [#allocation3]
    $region5: #{tpu_custom_call.1} parent=1 // pred_fallthru
      _
    // Predicated region
    $region6: #{tpu_custom_call.1} parent=1 // pred_check
      _
    $region7: #{tpu_custom_call.1} parent=1 // pred_check_branch
      %22 = sbr.rel (0) target = $region9
    $region8: #{tpu_custom_call.1} parent=1 // pred_region
      %s24 = ssub.s32 24576, 24576
      %25 = vsyncadd [#allocation6], %s24
      %s26 = sshll.u32 [#allocation5], 4
      %s27 = int_to_ptr.vmem [resolvable:$true] %s26
      %32 = dma.hbm_to_vmem [thread:$0]  %s1, 24576, %s27, [#allocation6], 128, 128, 8
    $region9: #{tpu_custom_call.1} parent=1 // pred_fallthru
      _
    // Predicated region
    $region10: #{tpu_custom_call.1} parent=1 // pred_check
      _
    $region11: #{tpu_custom_call.1} parent=1 // pred_check_branch
      %34 = sbr.rel (0) target = $region13
    $region12: #{tpu_custom_call.1} parent=1 // pred_region
      _
    $region13: #{tpu_custom_call.1} parent=1 // pred_fallthru
      _
    // Predicated region
    $region14: #{tpu_custom_call.1} parent=1 // pred_check
      _
    $region15: #{tpu_custom_call.1} parent=1 // pred_check_branch
      %36 = sbr.rel (0) target = $region17
    $region16: #{tpu_custom_call.1} parent=1 // pred_region
      %37 = dma.done [#allocation3], 384
    $region17: #{tpu_custom_call.1} parent=1 // pred_fallthru
      _
    // Predicated region
    $region18: #{tpu_custom_call.1} parent=1 // pred_check
      _
    $region19: #{tpu_custom_call.1} parent=1 // pred_check_branch
      %39 = sbr.rel (0) target = $region21
    $region20: #{tpu_custom_call.1} parent=1 // pred_region
      %40 = dma.done [#allocation6], 24576
    $region21: #{tpu_custom_call.1} parent=1 // pred_fallthru
      _
    %v41 = vld [vmem:[#allocation2] sm:$0xff]
    %v42 = vld [vmem:[#allocation2 + $0x8] sm:$0xff]
    %v43 = vld [vmem:[#allocation2 + $0x10] sm:$0xff]
    %v44 = vld [vmem:[#allocation5] sm:$0xff]
    %v45 = vld [vmem:[#allocation5 + $0x8] sm:$0xff]
    %v46 = vld [vmem:[#allocation5 + $0x10] sm:$0xff]
    %v47 = vld [vmem:[#allocation5 + $0x18] sm:$0xff]
    %v48 = vld [vmem:[#allocation5 + $0x20] sm:$0xff]
    %v49 = vld [vmem:[#allocation5 + $0x28] sm:$0xff]
    %v50 = vld [vmem:[#allocation5 + $0x30] sm:$0xff]
    %v51 = vld [vmem:[#allocation5 + $0x38] sm:$0xff]
    %v52 = vld [vmem:[#allocation5 + $0x40] sm:$0xff]
    %v53 = vld [vmem:[#allocation5 + $0x48] sm:$0xff]
    %v54 = vld [vmem:[#allocation5 + $0x50] sm:$0xff]
    %v55 = vld [vmem:[#allocation5 + $0x58] sm:$0xff]
    %v56 = vld [vmem:[#allocation5 + $0x60] sm:$0xff]
    %v57 = vld [vmem:[#allocation5 + $0x68] sm:$0xff]
    %v58 = vld [vmem:[#allocation5 + $0x70] sm:$0xff]
    %v59 = vld [vmem:[#allocation5 + $0x78] sm:$0xff]
    %v60 = vld [vmem:[#allocation5 + $0x80] sm:$0xff]
    %v61 = vld [vmem:[#allocation5 + $0x88] sm:$0xff]
    %v62 = vld [vmem:[#allocation5 + $0x90] sm:$0xff]
    %v63 = vld [vmem:[#allocation5 + $0x98] sm:$0xff]
    %v64 = vld [vmem:[#allocation5 + $0xa0] sm:$0xff]
    %v65 = vld [vmem:[#allocation5 + $0xa8] sm:$0xff]
    %v66 = vld [vmem:[#allocation5 + $0xb0] sm:$0xff]
    %v67 = vld [vmem:[#allocation5 + $0xb8] sm:$0xff]
    %v68 = vld [vmem:[#allocation5 + $0xc0] sm:$0xff]
    %v69 = vld [vmem:[#allocation5 + $0xc8] sm:$0xff]
    %v70 = vld [vmem:[#allocation5 + $0xd0] sm:$0xff]
    %v71 = vld [vmem:[#allocation5 + $0xd8] sm:$0xff]
    %v72 = vld [vmem:[#allocation5 + $0xe0] sm:$0xff]
    %v73 = vld [vmem:[#allocation5 + $0xe8] sm:$0xff]
    %v74 = vld [vmem:[#allocation5 + $0xf0] sm:$0xff]
    %v75 = vld [vmem:[#allocation5 + $0xf8] sm:$0xff]
    %v76 = vld [vmem:[#allocation5 + $0x100] sm:$0xff]
    %v77 = vld [vmem:[#allocation5 + $0x108] sm:$0xff]
    %v78 = vld [vmem:[#allocation5 + $0x110] sm:$0xff]
    %v79 = vld [vmem:[#allocation5 + $0x118] sm:$0xff]
    %v80 = vld [vmem:[#allocation5 + $0x120] sm:$0xff]
    %v81 = vld [vmem:[#allocation5 + $0x128] sm:$0xff]
    %v82 = vld [vmem:[#allocation5 + $0x130] sm:$0xff]
    %v83 = vld [vmem:[#allocation5 + $0x138] sm:$0xff]
    %v84 = vld [vmem:[#allocation5 + $0x140] sm:$0xff]
    %v85 = vld [vmem:[#allocation5 + $0x148] sm:$0xff]
    %v86 = vld [vmem:[#allocation5 + $0x150] sm:$0xff]
    %v87 = vld [vmem:[#allocation5 + $0x158] sm:$0xff]
    %v88 = vld [vmem:[#allocation5 + $0x160] sm:$0xff]
    %v89 = vld [vmem:[#allocation5 + $0x168] sm:$0xff]
    %v90 = vld [vmem:[#allocation5 + $0x170] sm:$0xff]
    %v91 = vld [vmem:[#allocation5 + $0x178] sm:$0xff]
    %v92 = vld [vmem:[#allocation5 + $0x180] sm:$0xff]
    %v93 = vld [vmem:[#allocation5 + $0x188] sm:$0xff]
    %v94 = vld [vmem:[#allocation5 + $0x190] sm:$0xff]
    %v95 = vld [vmem:[#allocation5 + $0x198] sm:$0xff]
    %v96 = vld [vmem:[#allocation5 + $0x1a0] sm:$0xff]
    %v97 = vld [vmem:[#allocation5 + $0x1a8] sm:$0xff]
    %v98 = vld [vmem:[#allocation5 + $0x1b0] sm:$0xff]
    %v99 = vld [vmem:[#allocation5 + $0x1b8] sm:$0xff]
    %v100 = vld [vmem:[#allocation5 + $0x1c0] sm:$0xff]
    %v101 = vld [vmem:[#allocation5 + $0x1c8] sm:$0xff]
    %v102 = vld [vmem:[#allocation5 + $0x1d0] sm:$0xff]
    %v103 = vld [vmem:[#allocation5 + $0x1d8] sm:$0xff]
    %v104 = vld [vmem:[#allocation5 + $0x1e0] sm:$0xff]
    %v105 = vld [vmem:[#allocation5 + $0x1e8] sm:$0xff]
    %v106 = vld [vmem:[#allocation5 + $0x1f0] sm:$0xff]
    %v107 = vld [vmem:[#allocation5 + $0x1f8] sm:$0xff]
    %v108 = vld [vmem:[#allocation5 + $0x200] sm:$0xff]
    %v109 = vld [vmem:[#allocation5 + $0x208] sm:$0xff]
    %v110 = vld [vmem:[#allocation5 + $0x210] sm:$0xff]
    %v111 = vld [vmem:[#allocation5 + $0x218] sm:$0xff]
    %v112 = vld [vmem:[#allocation5 + $0x220] sm:$0xff]
    %v113 = vld [vmem:[#allocation5 + $0x228] sm:$0xff]
    %v114 = vld [vmem:[#allocation5 + $0x230] sm:$0xff]
    %v115 = vld [vmem:[#allocation5 + $0x238] sm:$0xff]
    %v116 = vld [vmem:[#allocation5 + $0x240] sm:$0xff]
    %v117 = vld [vmem:[#allocation5 + $0x248] sm:$0xff]
    %v118 = vld [vmem:[#allocation5 + $0x250] sm:$0xff]
    %v119 = vld [vmem:[#allocation5 + $0x258] sm:$0xff]
    %v120 = vld [vmem:[#allocation5 + $0x260] sm:$0xff]
    %v121 = vld [vmem:[#allocation5 + $0x268] sm:$0xff]
    %v122 = vld [vmem:[#allocation5 + $0x270] sm:$0xff]
    %v123 = vld [vmem:[#allocation5 + $0x278] sm:$0xff]
    %v124 = vld [vmem:[#allocation5 + $0x280] sm:$0xff]
    %v125 = vld [vmem:[#allocation5 + $0x288] sm:$0xff]
    %v126 = vld [vmem:[#allocation5 + $0x290] sm:$0xff]
    %v127 = vld [vmem:[#allocation5 + $0x298] sm:$0xff]
    %v128 = vld [vmem:[#allocation5 + $0x2a0] sm:$0xff]
    %v129 = vld [vmem:[#allocation5 + $0x2a8] sm:$0xff]
    %v130 = vld [vmem:[#allocation5 + $0x2b0] sm:$0xff]
    %v131 = vld [vmem:[#allocation5 + $0x2b8] sm:$0xff]
    %v132 = vld [vmem:[#allocation5 + $0x2c0] sm:$0xff]
    %v133 = vld [vmem:[#allocation5 + $0x2c8] sm:$0xff]
    %v134 = vld [vmem:[#allocation5 + $0x2d0] sm:$0xff]
    %v135 = vld [vmem:[#allocation5 + $0x2d8] sm:$0xff]
    %v136 = vld [vmem:[#allocation5 + $0x2e0] sm:$0xff]
    %v137 = vld [vmem:[#allocation5 + $0x2e8] sm:$0xff]
    %v138 = vld [vmem:[#allocation5 + $0x2f0] sm:$0xff]
    %v139 = vld [vmem:[#allocation5 + $0x2f8] sm:$0xff]
    %v140 = vld [vmem:[#allocation5 + $0x300] sm:$0xff]
    %v141 = vld [vmem:[#allocation5 + $0x308] sm:$0xff]
    %v142 = vld [vmem:[#allocation5 + $0x310] sm:$0xff]
    %v143 = vld [vmem:[#allocation5 + $0x318] sm:$0xff]
    %v144 = vld [vmem:[#allocation5 + $0x320] sm:$0xff]
    %v145 = vld [vmem:[#allocation5 + $0x328] sm:$0xff]
    %v146 = vld [vmem:[#allocation5 + $0x330] sm:$0xff]
    %v147 = vld [vmem:[#allocation5 + $0x338] sm:$0xff]
    %v148 = vld [vmem:[#allocation5 + $0x340] sm:$0xff]
    %v149 = vld [vmem:[#allocation5 + $0x348] sm:$0xff]
    %v150 = vld [vmem:[#allocation5 + $0x350] sm:$0xff]
    %v151 = vld [vmem:[#allocation5 + $0x358] sm:$0xff]
    %v152 = vld [vmem:[#allocation5 + $0x360] sm:$0xff]
    %v153 = vld [vmem:[#allocation5 + $0x368] sm:$0xff]
    %v154 = vld [vmem:[#allocation5 + $0x370] sm:$0xff]
    %v155 = vld [vmem:[#allocation5 + $0x378] sm:$0xff]
    %v156 = vld [vmem:[#allocation5 + $0x380] sm:$0xff]
    %v157 = vld [vmem:[#allocation5 + $0x388] sm:$0xff]
    %v158 = vld [vmem:[#allocation5 + $0x390] sm:$0xff]
    %v159 = vld [vmem:[#allocation5 + $0x398] sm:$0xff]
    %v160 = vld [vmem:[#allocation5 + $0x3a0] sm:$0xff]
    %v161 = vld [vmem:[#allocation5 + $0x3a8] sm:$0xff]
    %v162 = vld [vmem:[#allocation5 + $0x3b0] sm:$0xff]
    %v163 = vld [vmem:[#allocation5 + $0x3b8] sm:$0xff]
    %v164 = vld [vmem:[#allocation5 + $0x3c0] sm:$0xff]
    %v165 = vld [vmem:[#allocation5 + $0x3c8] sm:$0xff]
    %v166 = vld [vmem:[#allocation5 + $0x3d0] sm:$0xff]
    %v167 = vld [vmem:[#allocation5 + $0x3d8] sm:$0xff]
    %v168 = vld [vmem:[#allocation5 + $0x3e0] sm:$0xff]
    %v169 = vld [vmem:[#allocation5 + $0x3e8] sm:$0xff]
    %v170 = vld [vmem:[#allocation5 + $0x3f0] sm:$0xff]
    %v171 = vld [vmem:[#allocation5 + $0x3f8] sm:$0xff]
    %v172 = vld [vmem:[#allocation5 + $0x400] sm:$0xff]
    %v173 = vld [vmem:[#allocation5 + $0x408] sm:$0xff]
    %v174 = vld [vmem:[#allocation5 + $0x410] sm:$0xff]
    %v175 = vld [vmem:[#allocation5 + $0x418] sm:$0xff]
    %v176 = vld [vmem:[#allocation5 + $0x420] sm:$0xff]
    %v177 = vld [vmem:[#allocation5 + $0x428] sm:$0xff]
    %v178 = vld [vmem:[#allocation5 + $0x430] sm:$0xff]
    %v179 = vld [vmem:[#allocation5 + $0x438] sm:$0xff]
    %v180 = vld [vmem:[#allocation5 + $0x440] sm:$0xff]
    %v181 = vld [vmem:[#allocation5 + $0x448] sm:$0xff]
    %v182 = vld [vmem:[#allocation5 + $0x450] sm:$0xff]
    %v183 = vld [vmem:[#allocation5 + $0x458] sm:$0xff]
    %v184 = vld [vmem:[#allocation5 + $0x460] sm:$0xff]
    %v185 = vld [vmem:[#allocation5 + $0x468] sm:$0xff]
    %v186 = vld [vmem:[#allocation5 + $0x470] sm:$0xff]
    %v187 = vld [vmem:[#allocation5 + $0x478] sm:$0xff]
    %v188 = vld [vmem:[#allocation5 + $0x480] sm:$0xff]
    %v189 = vld [vmem:[#allocation5 + $0x488] sm:$0xff]
    %v190 = vld [vmem:[#allocation5 + $0x490] sm:$0xff]
    %v191 = vld [vmem:[#allocation5 + $0x498] sm:$0xff]
    %v192 = vld [vmem:[#allocation5 + $0x4a0] sm:$0xff]
    %v193 = vld [vmem:[#allocation5 + $0x4a8] sm:$0xff]
    %v194 = vld [vmem:[#allocation5 + $0x4b0] sm:$0xff]
    %v195 = vld [vmem:[#allocation5 + $0x4b8] sm:$0xff]
    %v196 = vld [vmem:[#allocation5 + $0x4c0] sm:$0xff]
    %v197 = vld [vmem:[#allocation5 + $0x4c8] sm:$0xff]
    %v198 = vld [vmem:[#allocation5 + $0x4d0] sm:$0xff]
    %v199 = vld [vmem:[#allocation5 + $0x4d8] sm:$0xff]
    %v200 = vld [vmem:[#allocation5 + $0x4e0] sm:$0xff]
    %v201 = vld [vmem:[#allocation5 + $0x4e8] sm:$0xff]
    %v202 = vld [vmem:[#allocation5 + $0x4f0] sm:$0xff]
    %v203 = vld [vmem:[#allocation5 + $0x4f8] sm:$0xff]
    %v204 = vld [vmem:[#allocation5 + $0x500] sm:$0xff]
    %v205 = vld [vmem:[#allocation5 + $0x508] sm:$0xff]
    %v206 = vld [vmem:[#allocation5 + $0x510] sm:$0xff]
    %v207 = vld [vmem:[#allocation5 + $0x518] sm:$0xff]
    %v208 = vld [vmem:[#allocation5 + $0x520] sm:$0xff]
    %v209 = vld [vmem:[#allocation5 + $0x528] sm:$0xff]
    %v210 = vld [vmem:[#allocation5 + $0x530] sm:$0xff]
    %v211 = vld [vmem:[#allocation5 + $0x538] sm:$0xff]
    %v212 = vld [vmem:[#allocation5 + $0x540] sm:$0xff]
    %v213 = vld [vmem:[#allocation5 + $0x548] sm:$0xff]
    %v214 = vld [vmem:[#allocation5 + $0x550] sm:$0xff]
    %v215 = vld [vmem:[#allocation5 + $0x558] sm:$0xff]
    %v216 = vld [vmem:[#allocation5 + $0x560] sm:$0xff]
    %v217 = vld [vmem:[#allocation5 + $0x568] sm:$0xff]
    %v218 = vld [vmem:[#allocation5 + $0x570] sm:$0xff]
    %v219 = vld [vmem:[#allocation5 + $0x578] sm:$0xff]
    %v220 = vld [vmem:[#allocation5 + $0x580] sm:$0xff]
    %v221 = vld [vmem:[#allocation5 + $0x588] sm:$0xff]
    %v222 = vld [vmem:[#allocation5 + $0x590] sm:$0xff]
    %v223 = vld [vmem:[#allocation5 + $0x598] sm:$0xff]
    %v224 = vld [vmem:[#allocation5 + $0x5a0] sm:$0xff]
    %v225 = vld [vmem:[#allocation5 + $0x5a8] sm:$0xff]
    %v226 = vld [vmem:[#allocation5 + $0x5b0] sm:$0xff]
    %v227 = vld [vmem:[#allocation5 + $0x5b8] sm:$0xff]
    %v228 = vld [vmem:[#allocation5 + $0x5c0] sm:$0xff]
    %v229 = vld [vmem:[#allocation5 + $0x5c8] sm:$0xff]
    %v230 = vld [vmem:[#allocation5 + $0x5d0] sm:$0xff]
    %v231 = vld [vmem:[#allocation5 + $0x5d8] sm:$0xff]
    %v232 = vld [vmem:[#allocation5 + $0x5e0] sm:$0xff]
    %v233 = vld [vmem:[#allocation5 + $0x5e8] sm:$0xff]
    %v234 = vld [vmem:[#allocation5 + $0x5f0] sm:$0xff]
    %v235 = vld [vmem:[#allocation5 + $0x5f8] sm:$0xff]
    %v236 = vld [vmem:[%s2] sm:$0x1]
    %v238 = vlaneseq
    %v239 = vshrl.u32 %v238, 7
    %v240 = vsub.s32 0, %v239
    %v241 = vrot.slane %v236, %v240
    %v246 = vcombine.high %v41, %v41
    %v248 = vunpack.c.l.s4 1983009808
    %v249 = vunpack.c.0.s8 %v248
    %v250 = vlaneseq
    %v251 = vshrl.u32 %v250, 7
    %v252 = vsub.s32 %v249, %v251
    %v253 = vrot.slane %v41, %v252
    %v255 = vunpack.c.l.s4 1983009808
    %v256 = vunpack.c.0.s8 %v255
    %v257 = vlaneseq
    %v258 = vshrl.u32 %v257, 7
    %v259 = vsub.s32 %v256, %v258
    %v260 = vrot.slane %v246, %v259
    %v261 = vcombine.high %v253, %v253
    %v262 = vcombine.high %v260, %v260
    %v263 = vcombine.high %v42, %v42
    %v265 = vunpack.c.l.s4 1983009808
    %v266 = vunpack.c.0.s8 %v265
    %v267 = vlaneseq
    %v268 = vshrl.u32 %v267, 7
    %v269 = vsub.s32 %v266, %v268
    %v270 = vrot.slane %v42, %v269
    %v272 = vunpack.c.l.s4 1983009808
    %v273 = vunpack.c.0.s8 %v272
    %v274 = vlaneseq
    %v275 = vshrl.u32 %v274, 7
    %v276 = vsub.s32 %v273, %v275
    %v277 = vrot.slane %v263, %v276
    %v278 = vcombine.high %v270, %v270
    %v279 = vcombine.high %v277, %v277
    %v280 = vcombine.high %v43, %v43
    %v282 = vunpack.c.l.s4 1983009808
    %v283 = vunpack.c.0.s8 %v282
    %v284 = vlaneseq
    %v285 = vshrl.u32 %v284, 7
    %v286 = vsub.s32 %v283, %v285
    %v287 = vrot.slane %v43, %v286
    %v289 = vunpack.c.l.s4 1983009808
    %v290 = vunpack.c.0.s8 %v289
    %v291 = vlaneseq
    %v292 = vshrl.u32 %v291, 7
    %v293 = vsub.s32 %v290, %v292
    %v294 = vrot.slane %v280, %v293
    %v295 = vcombine.high %v287, %v287
    %v296 = vcombine.high %v294, %v294
    %309 = vmatprep.subr.mxu0 0.0
    %310 = vmatpush1.msra.mxu0 %v44
    %311 = vmatprep.subr.mxu0 0.0
    %312 = vmatpush1.msra.mxu0 %v45
    %313 = vmatprep.subr.mxu0 0.0
    %314 = vmatpush1.msra.mxu0 %v46
    %315 = vmatprep.subr.mxu0 0.0
    %316 = vmatpush1.msra.mxu0 %v47
    %317 = vmatprep.subr.mxu0 0.0
    %318 = vmatpush1.msra.mxu0 %v48
    %319 = vmatprep.subr.mxu0 0.0
    %320 = vmatpush1.msra.mxu0 %v49
    %321 = vmatprep.subr.mxu0 0.0
    %322 = vmatpush1.msra.mxu0 %v50
    %323 = vmatprep.subr.mxu0 0.0
    %324 = vmatpush1.msra.mxu0 %v51
    %325 = vmatprep.subr.mxu0 0.0
    %326 = vmatpush1.msra.mxu0 %v52
    %327 = vmatprep.subr.mxu0 0.0
    %328 = vmatpush1.msra.mxu0 %v53
    %329 = vmatprep.subr.mxu0 0.0
    %330 = vmatpush1.msra.mxu0 %v54
    %331 = vmatprep.subr.mxu0 0.0
    %332 = vmatpush1.msra.mxu0 %v55
    %333 = vmatprep.subr.mxu0 0.0
    %334 = vmatpush1.msra.mxu0 %v56
    %335 = vmatprep.subr.mxu0 0.0
    %336 = vmatpush1.msra.mxu0 %v57
    %337 = vmatprep.subr.mxu0 0.0
    %338 = vmatpush1.msra.mxu0 %v58
    %339 = vmatprep.subr.mxu0 0.0
    %340 = vmatpush1.msra.mxu0 %v59
    %341 = vmatprep.subr.mxu0 0.0
    %342 = vmatpush1.msra.mxu0 %v60
    %343 = vmatprep.subr.mxu0 0.0
    %344 = vmatpush1.msra.mxu0 %v61
    %345 = vmatprep.subr.mxu0 0.0
    %346 = vmatpush1.msra.mxu0 %v62
    %347 = vmatprep.subr.mxu0 0.0
    %348 = vmatpush1.msra.mxu0 %v63
    %349 = vmatprep.subr.mxu0 0.0
    %350 = vmatpush1.msra.mxu0 %v64
    %351 = vmatprep.subr.mxu0 0.0
    %352 = vmatpush1.msra.mxu0 %v65
    %353 = vmatprep.subr.mxu0 0.0
    %354 = vmatpush1.msra.mxu0 %v66
    %355 = vmatprep.subr.mxu0 0.0
    %356 = vmatpush1.msra.mxu0 %v67
    %357 = vmatprep.subr.mxu0 0.0
    %358 = vmatpush1.msra.mxu0 %v68
    %359 = vmatprep.subr.mxu0 0.0
    %360 = vmatpush1.msra.mxu0 %v69
    %361 = vmatprep.subr.mxu0 0.0
    %362 = vmatpush1.msra.mxu0 %v70
    %363 = vmatprep.subr.mxu0 0.0
    %364 = vmatpush1.msra.mxu0 %v71
    %365 = vmatprep.subr.mxu0 0.0
    %366 = vmatpush1.msra.mxu0 %v72
    %367 = vmatprep.subr.mxu0 0.0
    %368 = vmatpush1.msra.mxu0 %v73
    %369 = vmatprep.subr.mxu0 0.0
    %370 = vmatpush1.msra.mxu0 %v74
    %371 = vmatprep.subr.mxu0 0.0
    %372 = vmatpush1.msra.mxu0 %v75
    %373 = vmatprep.mubr.f32.mxu0 %v261
    %374 = vmatmul.mubr.f32.gmra.mrb[0].mxu0 %v253
    %v375 = vpop.f32.mrb[0].mxu0
    %v376 = vadd.f32 %v241, %v375
    %v377 = vpop.f32.mrb[0].mxu0
    %378 = vdwg.mxu0
    %379 = vmatprep.subr.mxu0 0.0
    %380 = vmatpush1.msra.mxu0 %v76
    %381 = vmatprep.subr.mxu0 0.0
    %382 = vmatpush1.msra.mxu0 %v77
    %383 = vmatprep.subr.mxu0 0.0
    %384 = vmatpush1.msra.mxu0 %v78
    %385 = vmatprep.subr.mxu0 0.0
    %386 = vmatpush1.msra.mxu0 %v79
    %387 = vmatprep.subr.mxu0 0.0
    %388 = vmatpush1.msra.mxu0 %v80
    %389 = vmatprep.subr.mxu0 0.0
    %390 = vmatpush1.msra.mxu0 %v81
    %391 = vmatprep.subr.mxu0 0.0
    %392 = vmatpush1.msra.mxu0 %v82
    %393 = vmatprep.subr.mxu0 0.0
    %394 = vmatpush1.msra.mxu0 %v83
    %395 = vmatprep.subr.mxu0 0.0
    %396 = vmatpush1.msra.mxu0 %v84
    %397 = vmatprep.subr.mxu0 0.0
    %398 = vmatpush1.msra.mxu0 %v85
    %399 = vmatprep.subr.mxu0 0.0
    %400 = vmatpush1.msra.mxu0 %v86
    %401 = vmatprep.subr.mxu0 0.0
    %402 = vmatpush1.msra.mxu0 %v87
    %403 = vmatprep.subr.mxu0 0.0
    %404 = vmatpush1.msra.mxu0 %v88
    %405 = vmatprep.subr.mxu0 0.0
    %406 = vmatpush1.msra.mxu0 %v89
    %407 = vmatprep.subr.mxu0 0.0
    %408 = vmatpush1.msra.mxu0 %v90
    %409 = vmatprep.subr.mxu0 0.0
    %410 = vmatpush1.msra.mxu0 %v91
    %411 = vmatprep.subr.mxu0 0.0
    %412 = vmatpush1.msra.mxu0 %v92
    %413 = vmatprep.subr.mxu0 0.0
    %414 = vmatpush1.msra.mxu0 %v93
    %415 = vmatprep.subr.mxu0 0.0
    %416 = vmatpush1.msra.mxu0 %v94
    %417 = vmatprep.subr.mxu0 0.0
    %418 = vmatpush1.msra.mxu0 %v95
    %419 = vmatprep.subr.mxu0 0.0
    %420 = vmatpush1.msra.mxu0 %v96
    %421 = vmatprep.subr.mxu0 0.0
    %422 = vmatpush1.msra.mxu0 %v97
    %423 = vmatprep.subr.mxu0 0.0
    %424 = vmatpush1.msra.mxu0 %v98
    %425 = vmatprep.subr.mxu0 0.0
    %426 = vmatpush1.msra.mxu0 %v99
    %427 = vmatprep.subr.mxu0 0.0
    %428 = vmatpush1.msra.mxu0 %v100
    %429 = vmatprep.subr.mxu0 0.0
    %430 = vmatpush1.msra.mxu0 %v101
    %431 = vmatprep.subr.mxu0 0.0
    %432 = vmatpush1.msra.mxu0 %v102
    %433 = vmatprep.subr.mxu0 0.0
    %434 = vmatpush1.msra.mxu0 %v103
    %435 = vmatprep.subr.mxu0 0.0
    %436 = vmatpush1.msra.mxu0 %v104
    %437 = vmatprep.subr.mxu0 0.0
    %438 = vmatpush1.msra.mxu0 %v105
    %439 = vmatprep.subr.mxu0 0.0
    %440 = vmatpush1.msra.mxu0 %v106
    %441 = vmatprep.subr.mxu0 0.0
    %442 = vmatpush1.msra.mxu0 %v107
    %443 = vmatprep.mubr.f32.mxu0 %v262
    %444 = vmatmul.mubr.f32.gmra.mrb[0].mxu0 %v260
    %v445 = vpop.f32.mrb[0].mxu0
    %v446 = vadd.f32 %v376, %v445
    %v447 = vpop.f32.mrb[0].mxu0
    %448 = vdwg.mxu0
    %449 = vmatprep.subr.mxu0 0.0
    %450 = vmatpush1.msra.mxu0 %v108
    %451 = vmatprep.subr.mxu0 0.0
    %452 = vmatpush1.msra.mxu0 %v109
    %453 = vmatprep.subr.mxu0 0.0
    %454 = vmatpush1.msra.mxu0 %v110
    %455 = vmatprep.subr.mxu0 0.0
    %456 = vmatpush1.msra.mxu0 %v111
    %457 = vmatprep.subr.mxu0 0.0
    %458 = vmatpush1.msra.mxu0 %v112
    %459 = vmatprep.subr.mxu0 0.0
    %460 = vmatpush1.msra.mxu0 %v113
    %461 = vmatprep.subr.mxu0 0.0
    %462 = vmatpush1.msra.mxu0 %v114
    %463 = vmatprep.subr.mxu0 0.0
    %464 = vmatpush1.msra.mxu0 %v115
    %465 = vmatprep.subr.mxu0 0.0
    %466 = vmatpush1.msra.mxu0 %v116
    %467 = vmatprep.subr.mxu0 0.0
    %468 = vmatpush1.msra.mxu0 %v117
    %469 = vmatprep.subr.mxu0 0.0
    %470 = vmatpush1.msra.mxu0 %v118
    %471 = vmatprep.subr.mxu0 0.0
    %472 = vmatpush1.msra.mxu0 %v119
    %473 = vmatprep.subr.mxu0 0.0
    %474 = vmatpush1.msra.mxu0 %v120
    %475 = vmatprep.subr.mxu0 0.0
    %476 = vmatpush1.msra.mxu0 %v121
    %477 = vmatprep.subr.mxu0 0.0
    %478 = vmatpush1.msra.mxu0 %v122
    %479 = vmatprep.subr.mxu0 0.0
    %480 = vmatpush1.msra.mxu0 %v123
    %481 = vmatprep.subr.mxu0 0.0
    %482 = vmatpush1.msra.mxu0 %v124
    %483 = vmatprep.subr.mxu0 0.0
    %484 = vmatpush1.msra.mxu0 %v125
    %485 = vmatprep.subr.mxu0 0.0
    %486 = vmatpush1.msra.mxu0 %v126
    %487 = vmatprep.subr.mxu0 0.0
    %488 = vmatpush1.msra.mxu0 %v127
    %489 = vmatprep.subr.mxu0 0.0
    %490 = vmatpush1.msra.mxu0 %v128
    %491 = vmatprep.subr.mxu0 0.0
    %492 = vmatpush1.msra.mxu0 %v129
    %493 = vmatprep.subr.mxu0 0.0
    %494 = vmatpush1.msra.mxu0 %v130
    %495 = vmatprep.subr.mxu0 0.0
    %496 = vmatpush1.msra.mxu0 %v131
    %497 = vmatprep.subr.mxu0 0.0
    %498 = vmatpush1.msra.mxu0 %v132
    %499 = vmatprep.subr.mxu0 0.0
    %500 = vmatpush1.msra.mxu0 %v133
    %501 = vmatprep.subr.mxu0 0.0
    %502 = vmatpush1.msra.mxu0 %v134
    %503 = vmatprep.subr.mxu0 0.0
    %504 = vmatpush1.msra.mxu0 %v135
    %505 = vmatprep.subr.mxu0 0.0
    %506 = vmatpush1.msra.mxu0 %v136
    %507 = vmatprep.subr.mxu0 0.0
    %508 = vmatpush1.msra.mxu0 %v137
    %509 = vmatprep.subr.mxu0 0.0
    %510 = vmatpush1.msra.mxu0 %v138
    %511 = vmatprep.subr.mxu0 0.0
    %512 = vmatpush1.msra.mxu0 %v139
    %513 = vmatprep.mubr.f32.mxu0 %v278
    %514 = vmatmul.mubr.f32.gmra.mrb[0].mxu0 %v270
    %v515 = vpop.f32.mrb[0].mxu0
    %v516 = vadd.f32 %v446, %v515
    %v517 = vpop.f32.mrb[0].mxu0
    %518 = vdwg.mxu0
    %519 = vmatprep.subr.mxu0 0.0
    %520 = vmatpush1.msra.mxu0 %v140
    %521 = vmatprep.subr.mxu0 0.0
    %522 = vmatpush1.msra.mxu0 %v141
    %523 = vmatprep.subr.mxu0 0.0
    %524 = vmatpush1.msra.mxu0 %v142
    %525 = vmatprep.subr.mxu0 0.0
    %526 = vmatpush1.msra.mxu0 %v143
    %527 = vmatprep.subr.mxu0 0.0
    %528 = vmatpush1.msra.mxu0 %v144
    %529 = vmatprep.subr.mxu0 0.0
    %530 = vmatpush1.msra.mxu0 %v145
    %531 = vmatprep.subr.mxu0 0.0
    %532 = vmatpush1.msra.mxu0 %v146
    %533 = vmatprep.subr.mxu0 0.0
    %534 = vmatpush1.msra.mxu0 %v147
    %535 = vmatprep.subr.mxu0 0.0
    %536 = vmatpush1.msra.mxu0 %v148
    %537 = vmatprep.subr.mxu0 0.0
    %538 = vmatpush1.msra.mxu0 %v149
    %539 = vmatprep.subr.mxu0 0.0
    %540 = vmatpush1.msra.mxu0 %v150
    %541 = vmatprep.subr.mxu0 0.0
    %542 = vmatpush1.msra.mxu0 %v151
    %543 = vmatprep.subr.mxu0 0.0
    %544 = vmatpush1.msra.mxu0 %v152
    %545 = vmatprep.subr.mxu0 0.0
    %546 = vmatpush1.msra.mxu0 %v153
    %547 = vmatprep.subr.mxu0 0.0
    %548 = vmatpush1.msra.mxu0 %v154
    %549 = vmatprep.subr.mxu0 0.0
    %550 = vmatpush1.msra.mxu0 %v155
    %551 = vmatprep.subr.mxu0 0.0
    %552 = vmatpush1.msra.mxu0 %v156
    %553 = vmatprep.subr.mxu0 0.0
    %554 = vmatpush1.msra.mxu0 %v157
    %555 = vmatprep.subr.mxu0 0.0
    %556 = vmatpush1.msra.mxu0 %v158
    %557 = vmatprep.subr.mxu0 0.0
    %558 = vmatpush1.msra.mxu0 %v159
    %559 = vmatprep.subr.mxu0 0.0
    %560 = vmatpush1.msra.mxu0 %v160
    %561 = vmatprep.subr.mxu0 0.0
    %562 = vmatpush1.msra.mxu0 %v161
    %563 = vmatprep.subr.mxu0 0.0
    %564 = vmatpush1.msra.mxu0 %v162
    %565 = vmatprep.subr.mxu0 0.0
    %566 = vmatpush1.msra.mxu0 %v163
    %567 = vmatprep.subr.mxu0 0.0
    %568 = vmatpush1.msra.mxu0 %v164
    %569 = vmatprep.subr.mxu0 0.0
    %570 = vmatpush1.msra.mxu0 %v165
    %571 = vmatprep.subr.mxu0 0.0
    %572 = vmatpush1.msra.mxu0 %v166
    %573 = vmatprep.subr.mxu0 0.0
    %574 = vmatpush1.msra.mxu0 %v167
    %575 = vmatprep.subr.mxu0 0.0
    %576 = vmatpush1.msra.mxu0 %v168
    %577 = vmatprep.subr.mxu0 0.0
    %578 = vmatpush1.msra.mxu0 %v169
    %579 = vmatprep.subr.mxu0 0.0
    %580 = vmatpush1.msra.mxu0 %v170
    %581 = vmatprep.subr.mxu0 0.0
    %582 = vmatpush1.msra.mxu0 %v171
    %583 = vmatprep.mubr.f32.mxu0 %v279
    %584 = vmatmul.mubr.f32.gmra.mrb[0].mxu0 %v277
    %v585 = vpop.f32.mrb[0].mxu0
    %v586 = vadd.f32 %v516, %v585
    %v587 = vpop.f32.mrb[0].mxu0
    %588 = vdwg.mxu0
    %589 = vmatprep.subr.mxu0 0.0
    %590 = vmatpush1.msra.mxu0 %v172
    %591 = vmatprep.subr.mxu0 0.0
    %592 = vmatpush1.msra.mxu0 %v173
    %593 = vmatprep.subr.mxu0 0.0
    %594 = vmatpush1.msra.mxu0 %v174
    %595 = vmatprep.subr.mxu0 0.0
    %596 = vmatpush1.msra.mxu0 %v175
    %597 = vmatprep.subr.mxu0 0.0
    %598 = vmatpush1.msra.mxu0 %v176
    %599 = vmatprep.subr.mxu0 0.0
    %600 = vmatpush1.msra.mxu0 %v177
    %601 = vmatprep.subr.mxu0 0.0
    %602 = vmatpush1.msra.mxu0 %v178
    %603 = vmatprep.subr.mxu0 0.0
    %604 = vmatpush1.msra.mxu0 %v179
    %605 = vmatprep.subr.mxu0 0.0
    %606 = vmatpush1.msra.mxu0 %v180
    %607 = vmatprep.subr.mxu0 0.0
    %608 = vmatpush1.msra.mxu0 %v181
    %609 = vmatprep.subr.mxu0 0.0
    %610 = vmatpush1.msra.mxu0 %v182
    %611 = vmatprep.subr.mxu0 0.0
    %612 = vmatpush1.msra.mxu0 %v183
    %613 = vmatprep.subr.mxu0 0.0
    %614 = vmatpush1.msra.mxu0 %v184
    %615 = vmatprep.subr.mxu0 0.0
    %616 = vmatpush1.msra.mxu0 %v185
    %617 = vmatprep.subr.mxu0 0.0
    %618 = vmatpush1.msra.mxu0 %v186
    %619 = vmatprep.subr.mxu0 0.0
    %620 = vmatpush1.msra.mxu0 %v187
    %621 = vmatprep.subr.mxu0 0.0
    %622 = vmatpush1.msra.mxu0 %v188
    %623 = vmatprep.subr.mxu0 0.0
    %624 = vmatpush1.msra.mxu0 %v189
    %625 = vmatprep.subr.mxu0 0.0
    %626 = vmatpush1.msra.mxu0 %v190
    %627 = vmatprep.subr.mxu0 0.0
    %628 = vmatpush1.msra.mxu0 %v191
    %629 = vmatprep.subr.mxu0 0.0
    %630 = vmatpush1.msra.mxu0 %v192
    %631 = vmatprep.subr.mxu0 0.0
    %632 = vmatpush1.msra.mxu0 %v193
    %633 = vmatprep.subr.mxu0 0.0
    %634 = vmatpush1.msra.mxu0 %v194
    %635 = vmatprep.subr.mxu0 0.0
    %636 = vmatpush1.msra.mxu0 %v195
    %637 = vmatprep.subr.mxu0 0.0
    %638 = vmatpush1.msra.mxu0 %v196
    %639 = vmatprep.subr.mxu0 0.0
    %640 = vmatpush1.msra.mxu0 %v197
    %641 = vmatprep.subr.mxu0 0.0
    %642 = vmatpush1.msra.mxu0 %v198
    %643 = vmatprep.subr.mxu0 0.0
    %644 = vmatpush1.msra.mxu0 %v199
    %645 = vmatprep.subr.mxu0 0.0
    %646 = vmatpush1.msra.mxu0 %v200
    %647 = vmatprep.subr.mxu0 0.0
    %648 = vmatpush1.msra.mxu0 %v201
    %649 = vmatprep.subr.mxu0 0.0
    %650 = vmatpush1.msra.mxu0 %v202
    %651 = vmatprep.subr.mxu0 0.0
    %652 = vmatpush1.msra.mxu0 %v203
    %653 = vmatprep.mubr.f32.mxu0 %v295
    %654 = vmatmul.mubr.f32.gmra.mrb[0].mxu0 %v287
    %v655 = vpop.f32.mrb[0].mxu0
    %v656 = vadd.f32 %v586, %v655
    %v657 = vpop.f32.mrb[0].mxu0
    %658 = vdwg.mxu0
    %659 = vmatprep.subr.mxu0 0.0
    %660 = vmatpush1.msra.mxu0 %v204
    %661 = vmatprep.subr.mxu0 0.0
    %662 = vmatpush1.msra.mxu0 %v205
    %663 = vmatprep.subr.mxu0 0.0
    %664 = vmatpush1.msra.mxu0 %v206
    %665 = vmatprep.subr.mxu0 0.0
    %666 = vmatpush1.msra.mxu0 %v207
    %667 = vmatprep.subr.mxu0 0.0
    %668 = vmatpush1.msra.mxu0 %v208
    %669 = vmatprep.subr.mxu0 0.0
    %670 = vmatpush1.msra.mxu0 %v209
    %671 = vmatprep.subr.mxu0 0.0
    %672 = vmatpush1.msra.mxu0 %v210
    %673 = vmatprep.subr.mxu0 0.0
    %674 = vmatpush1.msra.mxu0 %v211
    %675 = vmatprep.subr.mxu0 0.0
    %676 = vmatpush1.msra.mxu0 %v212
    %677 = vmatprep.subr.mxu0 0.0
    %678 = vmatpush1.msra.mxu0 %v213
    %679 = vmatprep.subr.mxu0 0.0
    %680 = vmatpush1.msra.mxu0 %v214
    %681 = vmatprep.subr.mxu0 0.0
    %682 = vmatpush1.msra.mxu0 %v215
    %683 = vmatprep.subr.mxu0 0.0
    %684 = vmatpush1.msra.mxu0 %v216
    %685 = vmatprep.subr.mxu0 0.0
    %686 = vmatpush1.msra.mxu0 %v217
    %687 = vmatprep.subr.mxu0 0.0
    %688 = vmatpush1.msra.mxu0 %v218
    %689 = vmatprep.subr.mxu0 0.0
    %690 = vmatpush1.msra.mxu0 %v219
    %691 = vmatprep.subr.mxu0 0.0
    %692 = vmatpush1.msra.mxu0 %v220
    %693 = vmatprep.subr.mxu0 0.0
    %694 = vmatpush1.msra.mxu0 %v221
    %695 = vmatprep.subr.mxu0 0.0
    %696 = vmatpush1.msra.mxu0 %v222
    %697 = vmatprep.subr.mxu0 0.0
    %698 = vmatpush1.msra.mxu0 %v223
    %699 = vmatprep.subr.mxu0 0.0
    %700 = vmatpush1.msra.mxu0 %v224
    %701 = vmatprep.subr.mxu0 0.0
    %702 = vmatpush1.msra.mxu0 %v225
    %703 = vmatprep.subr.mxu0 0.0
    %704 = vmatpush1.msra.mxu0 %v226
    %705 = vmatprep.subr.mxu0 0.0
    %706 = vmatpush1.msra.mxu0 %v227
    %707 = vmatprep.subr.mxu0 0.0
    %708 = vmatpush1.msra.mxu0 %v228
    %709 = vmatprep.subr.mxu0 0.0
    %710 = vmatpush1.msra.mxu0 %v229
    %711 = vmatprep.subr.mxu0 0.0
    %712 = vmatpush1.msra.mxu0 %v230
    %713 = vmatprep.subr.mxu0 0.0
    %714 = vmatpush1.msra.mxu0 %v231
    %715 = vmatprep.subr.mxu0 0.0
    %716 = vmatpush1.msra.mxu0 %v232
    %717 = vmatprep.subr.mxu0 0.0
    %718 = vmatpush1.msra.mxu0 %v233
    %719 = vmatprep.subr.mxu0 0.0
    %720 = vmatpush1.msra.mxu0 %v234
    %721 = vmatprep.subr.mxu0 0.0
    %722 = vmatpush1.msra.mxu0 %v235
    %723 = vmatprep.mubr.f32.mxu0 %v296
    %724 = vmatmul.mubr.f32.gmra.mrb[0].mxu0 %v294
    %v725 = vpop.f32.mrb[0].mxu0
    %v726 = vadd.f32 %v656, %v725
    %v727 = vpop.f32.mrb[0].mxu0
    %728 = vdwg.mxu0
    %729 = vst [vmem:[#allocation7] sm:$0x3] %v726
    // Predicated region
    $region22: #{tpu_custom_call.1} parent=1 // pred_check
      _
    $region23: #{tpu_custom_call.1} parent=1 // pred_check_branch
      %731 = sbr.rel (0) target = $region25
    $region24: #{tpu_custom_call.1} parent=1 // pred_region
      %s733 = ssub.s32 32, 32
      %734 = vsyncadd [#allocation4], %s733
      %s736 = sshll.u32 [#allocation7], 4
      %s737 = int_to_ptr.vmem [resolvable:$true] %s736
      %739 = dma.vmem_to_hbm [thread:$0]  %s737, 32, %s3, [#allocation4]
    $region25: #{tpu_custom_call.1} parent=1 // pred_fallthru
      _
    // Predicated region
    $region26: #{tpu_custom_call.1} parent=1 // pred_check
      _
    $region27: #{tpu_custom_call.1} parent=1 // pred_check_branch
      %741 = sbr.rel (0) target = $region29
    $region28: #{tpu_custom_call.1} parent=1 // pred_region
      %742 = dma.done [#allocation4], 32
    $region29: #{tpu_custom_call.1} parent=1 // pred_fallthru
      _
    %743 = vsyncpa [#allocation3], 1
    %744 = vsyncpa [#allocation6], 1
    %745 = vsyncpa [#allocation4], 1

</llo_original>
